<compile_context>
chip_gen: v5e
topology: v5e:2x2
jax: 0.10.0
libtpu: 0.0.40
codegen_flags: <defaults>
</compile_context>

<pallas_src>
import jax
import jax.numpy as jnp
from jax import lax
from jax.experimental import pallas as pl
from jax.experimental.pallas import tpu as pltpu

LANES = 128
TARGET_BLOCK_BYTES = 2 << 20   # ~2 MiB per input block (dtype-aware rows)
CHUNK_ROWS_MAX = 512           # intra-block reduction chunk (rows)


def _round_up(n: int, m: int) -> int:
    return ((n + m - 1) // m) * m


def _make_mse_sum_kernel(tile_rows, chunk_rows, valid_rows, blocks_per_core,
                         needs_mask, first_masked_block):
    """Kernel with all static tiling / masking parameters baked in."""
    n_chunks = tile_rows // chunk_rows

    def tile_partial(x_ref, t_ref, row_base, masked):
        # Sum of squared diffs over the whole tile, reduced to an (8,128)
        # vreg-shaped slab with pure VPU adds (no per-step XLU reduction).
        def body(ci, acc):
            r0 = pl.multiple_of(ci * chunk_rows, chunk_rows)
            xd = x_ref[pl.ds(r0, chunk_rows), :].astype(jnp.float32)
            td = t_ref[pl.ds(r0, chunk_rows), :].astype(jnp.float32)
            d = xd - td
            sq = d * d
            if masked:
                gi = (row_base + r0) + lax.broadcasted_iota(
                    jnp.int32, (chunk_rows, LANES), 0)
                sq = jnp.where(gi < valid_rows, sq, jnp.float32(0.0))
            return acc + jnp.sum(sq.reshape(chunk_rows // 8, 8, LANES), axis=0)

        return lax.fori_loop(0, n_chunks, body,
                             jnp.zeros((8, LANES), jnp.float32))

    def kernel(x_ref, t_ref, o_ref):
        c = pl.program_id(0)   # core axis ("parallel")
        i = pl.program_id(1)   # streaming / reduction axis ("arbitrary")

        # Zero this core's resident (8,128) output slab on its first step.
        @pl.when(i == 0)
        def _():
            o_ref[...] = jnp.zeros_like(o_ref)

        if needs_mask:
            global_block = c * blocks_per_core + i
            is_edge = global_block >= first_masked_block

            @pl.when(is_edge)
            def _():
                o_ref[...] += tile_partial(
                    x_ref, t_ref, global_block * tile_rows, True)

            @pl.when(jnp.logical_not(is_edge))
            def _():
                o_ref[...] += tile_partial(x_ref, t_ref, 0, False)
        else:
            o_ref[...] += tile_partial(x_ref, t_ref, 0, False)

    return kernel


def content_loss_mse(x: jax.Array, target: jax.Array,
                     *, block_bytes: int = TARGET_BLOCK_BYTES) -> jax.Array:
    """MSE(x, target) with mean reduction over all elements (scalar f32)."""
    assert x.shape == target.shape, "input and target must have the same shape"
    n_elems = x.size
    assert n_elems > 0

    xf = jnp.ravel(x)
    tf = jnp.ravel(target)

    # Rare ragged-lane case: pad the tail to a multiple of 128. Identical zero
    # padding in both arrays contributes exactly 0 to the squared-diff sum.
    pad = (-n_elems) % LANES
    if pad:
        xf = jnp.pad(xf, (0, pad))
        tf = jnp.pad(tf, (0, pad))

    rows = xf.size // LANES
    x2 = xf.reshape(rows, LANES)
    t2 = tf.reshape(rows, LANES)

    itemsize = jnp.dtype(x2.dtype).itemsize
    # dtype-aware block size: ~block_bytes per input block (4096 rows f32,
    # 8192 rows bf16 at the 2 MiB default).
    tile_rows = max(16, (block_bytes // (LANES * itemsize)) // 16 * 16)
    tile_rows = min(tile_rows, _round_up(rows, 16))
    if tile_rows > CHUNK_ROWS_MAX:
        tile_rows = _round_up(tile_rows, CHUNK_ROWS_MAX)
        chunk_rows = CHUNK_ROWS_MAX
    else:
        chunk_rows = tile_rows

    num_blocks = pl.cdiv(rows, tile_rows)

    # Dual-TensorCore split (v7x): each core streams half the blocks into its
    # own partial slab. On 1-TC chips the parallel axis just serializes.
    num_cores = 2 if num_blocks >= 2 else 1
    blocks_per_core = pl.cdiv(num_blocks, num_cores)
    total_blocks = num_cores * blocks_per_core

    has_partial_edge = (rows % tile_rows) != 0
    needs_mask = has_partial_edge or (total_blocks > num_blocks)
    first_masked_block = num_blocks - 1 if has_partial_edge else num_blocks

    if total_blocks > num_blocks:
        # Clamp duplicated block indices (odd block count across 2 cores);
        # the duplicates are fully masked to zero inside the kernel.
        def in_map(c, i):
            return (jnp.minimum(c * blocks_per_core + i, num_blocks - 1), 0)
    else:
        def in_map(c, i):
            return (c * blocks_per_core + i, 0)

    kernel = _make_mse_sum_kernel(tile_rows, chunk_rows, rows,
                                  blocks_per_core, needs_mask,
                                  first_masked_block)

    # 2 inputs x 2 pipeline buffers live at once; generous headroom but keep
    # the cap <= 48 MiB so it is valid on v7x's 64 MiB physical VMEM.
    block_bytes_actual = tile_rows * LANES * itemsize
    vmem_limit = int(min(48 << 20, max(32 << 20, 4 * block_bytes_actual)))

    partials = pl.pallas_call(
        kernel,
        out_shape=jax.ShapeDtypeStruct((num_cores, 8, LANES), jnp.float32),
        grid_spec=pltpu.PrefetchScalarGridSpec(
            num_scalar_prefetch=0,
            grid=(num_cores, blocks_per_core),
            in_specs=[
                pl.BlockSpec((tile_rows, LANES), in_map),
                pl.BlockSpec((tile_rows, LANES), in_map),
            ],
            out_specs=pl.BlockSpec((None, 8, LANES), lambda c, i: (c, 0, 0)),
        ),
        compiler_params=pltpu.CompilerParams(
            dimension_semantics=("parallel", "arbitrary"),
            vmem_limit_bytes=vmem_limit,
        ),
    )(x2, t2)

    # Single tiny cross-lane collapse + mean normalization outside the kernel.
    return (jnp.sum(partials) / jnp.float32(n_elems)).astype(jnp.float32)


if __name__ == "__main__":
    key = jax.random.PRNGKey(0)
    k_in, k_tgt = jax.random.split(key)

    # Small NCHW feature-map shape consistent with style-transfer content loss.
    shape = (2, 4, 16, 16)
    x = jax.random.normal(k_in, shape, dtype=jnp.float32)
    # "target" is a registered buffer in the PyTorch module; build a
    # deterministic synthetic target tensor of the same shape.
    target = jax.random.normal(k_tgt, shape, dtype=jnp.float32)

    loss = content_loss_mse(x, target)
    jax.block_until_ready(loss)
    ref = jnp.mean((x - target) ** 2)
    assert jnp.allclose(loss, ref, rtol=1e-6, atol=1e-6), (loss, ref)

    # Native bf16 path: streamed at half the HBM bytes, cast to f32 in-kernel.
    xb = x.astype(jnp.bfloat16)
    tb = target.astype(jnp.bfloat16)
    loss_b = content_loss_mse(xb, tb)
    jax.block_until_ready(loss_b)
    ref_b = jnp.mean((xb.astype(jnp.float32) - tb.astype(jnp.float32)) ** 2)
    assert jnp.allclose(loss_b, ref_b, rtol=1e-5, atol=1e-5), (loss_b, ref_b)

    # Ragged numel (not a multiple of 128) with a tiny block budget to exercise
    # multi-block streaming, the dual-core split, and the masked edge blocks.
    shape_r = (2, 3, 67, 59)
    xr = jax.random.normal(k_in, shape_r, dtype=jnp.float32)
    tr = jax.random.normal(k_tgt, shape_r, dtype=jnp.float32)
    loss_r = content_loss_mse(xr, tr, block_bytes=32 * 1024)
    jax.block_until_ready(loss_r)
    ref_r = jnp.mean((xr - tr) ** 2)
    assert jnp.allclose(loss_r, ref_r, rtol=1e-5, atol=1e-6), (loss_r, ref_r)

    # rows < 8 edge case (numel == 128): block extends past the 1-row array.
    xs = jax.random.normal(k_in, (1, 128), dtype=jnp.float32)
    ts = jax.random.normal(k_tgt, (1, 128), dtype=jnp.float32)
    loss_s = content_loss_mse(xs, ts)
    jax.block_until_ready(loss_s)
    ref_s = jnp.mean((xs - ts) ** 2)
    assert jnp.allclose(loss_s, ref_s, rtol=1e-6, atol=1e-6), (loss_s, ref_s)

    print("KERNEL_OK")
</pallas_src>

<mosaic_0001>
module attributes {stable_mosaic.version = 11 : i64} {
  func.func @kernel(%arg0: i32, %arg1: i32, %arg2: memref<16x128xf32, #tpu.memory_space<vmem>>, %arg3: memref<16x128xf32, #tpu.memory_space<vmem>>, %arg4: memref<1x8x128xf32, #tpu.memory_space<vmem>>) attributes {dimension_semantics = [#tpu.dimension_semantics<parallel>, #tpu.dimension_semantics<arbitrary>], iteration_bounds = array<i64: 1, 1>, scalar_prefetch = 0 : i64, scratch_operands = 0 : i64, tpu.core_type = #tpu.core_type<tc>, window_params = [{transform_indices = @transform_0, window_bounds = array<i64: 16, 128>}, {transform_indices = @transform_1, window_bounds = array<i64: 16, 128>}, {transform_indices = @transform_2, window_bounds = array<i64: 1, 8, 128>}]} {
    %c0_i32 = arith.constant 0 : i32
    %0 = arith.cmpi eq, %arg1, %c0_i32 : i32
    %1 = arith.extui %0 : i1 to i32
    %c0_i32_0 = arith.constant 0 : i32
    %2 = arith.cmpi ne, %1, %c0_i32_0 : i32
    scf.if %2 {
      %cst_10 = arith.constant 0.000000e+00 : f32
      %21 = vector.broadcast %cst_10 : f32 to vector<8x128xf32>
      %c0_11 = arith.constant 0 : index
      %c0_12 = arith.constant 0 : index
      %c0_13 = arith.constant 0 : index
      %22 = vector.load %arg4[%c0_11, %c0_12, %c0_13] : memref<1x8x128xf32, #tpu.memory_space<vmem>>, vector<1x8x128xf32>
      %23 = vector.shape_cast %22 : vector<1x8x128xf32> to vector<8x128xf32>
      %24 = vector.shape_cast %21 : vector<8x128xf32> to vector<1x8x128xf32>
      tpu.vector_store %arg4[%c0_11, %c0_12, %c0_13], %24 {strides = array<i32>} : memref<1x8x128xf32, #tpu.memory_space<vmem>>, vector<1x8x128xf32>,
    } else {
    }
    %c0 = arith.constant 0 : index
    %c0_1 = arith.constant 0 : index
    %c0_2 = arith.constant 0 : index
    %3 = vector.load %arg4[%c0, %c0_1, %c0_2] : memref<1x8x128xf32, #tpu.memory_space<vmem>>, vector<1x8x128xf32>
    %4 = vector.shape_cast %3 : vector<1x8x128xf32> to vector<8x128xf32>
    %cst = arith.constant 0.000000e+00 : f32
    %5 = vector.broadcast %cst : f32 to vector<8x128xf32>
    %c0_i32_3 = arith.constant 0 : i32
    %c16_i32 = arith.constant 16 : i32
    %6 = arith.muli %c0_i32_3, %c16_i32 : i32
    %7 = tpu.assume_multiple %6, 16 : i32
    %8 = arith.index_cast %7 : i32 to index
    %c0_4 = arith.constant 0 : index
    %9 = vector.load %arg2[%8, %c0_4] : memref<16x128xf32, #tpu.memory_space<vmem>>, vector<16x128xf32>
    %10 = arith.index_cast %7 : i32 to index
    %c0_5 = arith.constant 0 : index
    %11 = vector.load %arg3[%10, %c0_5] : memref<16x128xf32, #tpu.memory_space<vmem>>, vector<16x128xf32>
    %12 = arith.subf %9, %11 : vector<16x128xf32>
    %13 = arith.mulf %12, %12 : vector<16x128xf32>
    %14 = vector.shape_cast %13 : vector<16x128xf32> to vector<2x8x128xf32>
    %cst_6 = arith.constant dense<0.000000e+00> : vector<8x128xf32>
    %15 = vector.multi_reduction <add>, %14, %cst_6 [0] : vector<2x8x128xf32> to vector<8x128xf32>
    %16 = arith.addf %5, %15 : vector<8x128xf32>
    %c1_i32 = arith.constant 1 : i32
    %17 = arith.addf %4, %16 : vector<8x128xf32>
    %c0_7 = arith.constant 0 : index
    %c0_8 = arith.constant 0 : index
    %c0_9 = arith.constant 0 : index
    %18 = vector.load %arg4[%c0_7, %c0_8, %c0_9] : memref<1x8x128xf32, #tpu.memory_space<vmem>>, vector<1x8x128xf32>
    %19 = vector.shape_cast %18 : vector<1x8x128xf32> to vector<8x128xf32>
    %20 = vector.shape_cast %17 : vector<8x128xf32> to vector<1x8x128xf32>
    tpu.vector_store %arg4[%c0_7, %c0_8, %c0_9], %20 {strides = array<i32>} : memref<1x8x128xf32, #tpu.memory_space<vmem>>, vector<1x8x128xf32>,
    return
  }
  func.func @transform_0(%arg0: i32, %arg1: i32) -> (i32, i32) {
    %c1_i32 = arith.constant 1 : i32
    %0 = arith.muli %arg0, %c1_i32 : i32
    %1 = arith.addi %0, %arg1 : i32
    %c0_i32 = arith.constant 0 : i32
    %c0_i32_0 = arith.constant 0 : i32
    return %1, %c0_i32 : i32, i32
  }
  func.func @transform_1(%arg0: i32, %arg1: i32) -> (i32, i32) {
    %c1_i32 = arith.constant 1 : i32
    %0 = arith.muli %arg0, %c1_i32 : i32
    %1 = arith.addi %0, %arg1 : i32
    %c0_i32 = arith.constant 0 : i32
    %c0_i32_0 = arith.constant 0 : i32
    return %1, %c0_i32 : i32, i32
  }
  func.func @transform_2(%arg0: i32, %arg1: i32) -> (i32, i32, i32) {
    %c0_i32 = arith.constant 0 : i32
    %c0_i32_0 = arith.constant 0 : i32
    %c0_i32_1 = arith.constant 0 : i32
    return %arg0, %c0_i32, %c0_i32_0 : i32, i32, i32
  }
}

</mosaic_0001>

<llo_original>
// kernel: tpu_custom_call.1
$region0: #{tpu_custom_call.1}
  #allocation0 [shape = 'u32[]', space=smem, size = 0x4, offset = 0x4, fixed_abs, tag = 'smem constant byte address 0x4 - core index']
  #allocation1 [shape = 'u32[72,128]{1,0:T(1,128)}', space=vmem, size = 0x9000, scoped, tag = 'internal scratch']
  %s0 = inlined_call_operand.hbm [shape: f32[16,128], index: 0, kind: input, shape index: {}]
  %s1 = inlined_call_operand.hbm [shape: f32[16,128], index: 1, kind: input, shape index: {}]
  %s2 = inlined_call_operand.hbm [shape: f32[1,8,128], index: 2, kind: output, shape index: {}]
  %s3 = sld [smem:[#allocation0]]
  $region30: #{tpu_custom_call.1} parent=0
    _
  %s5 = ssub.s32 1, %s3
  %s6 = scalar_select 0, %s5, %s3
  $region1: #{tpu_custom_call.1} parent=0
    #allocation2 [shape = 'u8[8192]{0}', space=vmem, size = 0x2000, scoped, tag = 'input window, operand 0, single buffered']
    #allocation3 [shape = 's32[1]{0}', space=sflag, size = 0x4, scoped, tag = 'scoped memory for tpu_custom_call.1']
    #allocation4 [shape = 's32[1]{0}', space=sflag, size = 0x4, scoped, tag = 'scoped memory for tpu_custom_call.1']
    #allocation5 [shape = 'u8[8192]{0}', space=vmem, size = 0x2000, scoped, tag = 'input window, operand 1, single buffered']
    #allocation6 [shape = 's32[1]{0}', space=sflag, size = 0x4, scoped, tag = 'scoped memory for tpu_custom_call.1']
    #allocation7 [shape = 'u8[4096]{0}', space=vmem, size = 0x1000, scoped, tag = 'output window, operand 0, single buffered']
    %7 = vsyncpa [#allocation3], 0
    %8 = vsyncpa [#allocation6], 0
    %9 = vsyncpa [#allocation4], 0
    // Predicated region
    $region2: #{tpu_custom_call.1} parent=1 // pred_check
      _
    $region3: #{tpu_custom_call.1} parent=1 // pred_check_branch
      %11 = sbr.rel (0) target = $region5
    $region4: #{tpu_custom_call.1} parent=1 // pred_region
      %s12 = sadd.s32 0, 0
      %s13 = smul.u32 2, %s12
      %15 = vsyncadd [#allocation3], 0
      %s16 = smul.addr %s13, 8
      %s17 = scalar_lea.hbm %s0, %s16
      %s18 = sshll.u32 %s17, 4
      %s19 = int_to_ptr.hbm [resolvable:$true] %s18
      %s20 = sshll.u32 [#allocation2], 4
      %s21 = int_to_ptr.vmem [resolvable:$true] %s20
      %26 = dma.hbm_to_vmem [thread:$0]  %s19, 256, %s21, [#allocation3], 128, 128, 8
    $region5: #{tpu_custom_call.1} parent=1 // pred_fallthru
      _
    // Predicated region
    $region6: #{tpu_custom_call.1} parent=1 // pred_check
      _
    $region7: #{tpu_custom_call.1} parent=1 // pred_check_branch
      %28 = sbr.rel (0) target = $region9
    $region8: #{tpu_custom_call.1} parent=1 // pred_region
      %s29 = sadd.s32 0, 0
      %s30 = smul.u32 2, %s29
      %32 = vsyncadd [#allocation6], 0
      %s33 = smul.addr %s30, 8
      %s34 = scalar_lea.hbm %s1, %s33
      %s35 = sshll.u32 %s34, 4
      %s36 = int_to_ptr.hbm [resolvable:$true] %s35
      %s37 = sshll.u32 [#allocation5], 4
      %s38 = int_to_ptr.vmem [resolvable:$true] %s37
      %43 = dma.hbm_to_vmem [thread:$0]  %s36, 256, %s38, [#allocation6], 128, 128, 8
    $region9: #{tpu_custom_call.1} parent=1 // pred_fallthru
      _
    // Predicated region
    $region10: #{tpu_custom_call.1} parent=1 // pred_check
      _
    $region11: #{tpu_custom_call.1} parent=1 // pred_check_branch
      %45 = sbr.rel (0) target = $region13
    $region12: #{tpu_custom_call.1} parent=1 // pred_region
      %47 = dma.done [#allocation3], 256
    $region13: #{tpu_custom_call.1} parent=1 // pred_fallthru
      _
    // Predicated region
    $region14: #{tpu_custom_call.1} parent=1 // pred_check
      _
    $region15: #{tpu_custom_call.1} parent=1 // pred_check_branch
      %49 = sbr.rel (0) target = $region17
    $region16: #{tpu_custom_call.1} parent=1 // pred_region
      %51 = dma.done [#allocation6], 256
    $region17: #{tpu_custom_call.1} parent=1 // pred_fallthru
      _
    %s52 = sadd.s32 0, 0
    %s53 = smul.u32 2, %s52
    %s54 = sadd.s32 0, 0
    %s55 = smul.u32 2, %s54
    %p56 = scmp.eq.s32.totalorder 0, 0
    // Predicated region
    $region18: #{tpu_custom_call.1} parent=1 // pred_check
      %p57 = pneg %p56
    $region19: #{tpu_custom_call.1} parent=1 // pred_check_branch
      %59 = sbr.rel (%p57) target = $region21
    $region20: #{tpu_custom_call.1} parent=1 // pred_region
      %60 = vst [vmem:[#allocation7] sm:$0xff] 0.0
    $region21: #{tpu_custom_call.1} parent=1 // pred_fallthru
      _
    %v61 = vld [vmem:[#allocation7] sm:$0xff]
    %v62 = vld [vmem:[#allocation2] sm:$0xff]
    %v63 = vld [vmem:[#allocation2 + $0x8] sm:$0xff]
    %v64 = vld [vmem:[#allocation5] sm:$0xff]
    %v65 = vld [vmem:[#allocation5 + $0x8] sm:$0xff]
    %v66 = vsub.f32 %v62, %v64
    %v67 = vsub.f32 %v63, %v65
    %v68 = vmul.f32 %v66, %v66
    %v69 = vmul.f32 %v67, %v67
    %v70 = vadd.f32 %v68, %v69
    %v71 = vadd.f32 %v70, 0.0
    %v72 = vadd.f32 %v61, %v71
    %73 = vst [vmem:[#allocation7] sm:$0xff] %v72
    // Predicated region
    $region22: #{tpu_custom_call.1} parent=1 // pred_check
      _
    $region23: #{tpu_custom_call.1} parent=1 // pred_check_branch
      %75 = sbr.rel (0) target = $region25
    $region24: #{tpu_custom_call.1} parent=1 // pred_region
      %77 = vsyncadd [#allocation4], 0
      %s79 = sshll.u32 [#allocation7], 4
      %s80 = int_to_ptr.vmem [resolvable:$true] %s79
      %s81 = sshll.u32 %s2, 4
      %s82 = int_to_ptr.hbm [resolvable:$true] %s81
      %84 = dma.vmem_to_hbm [thread:$0]  %s80, 128, %s82, [#allocation4]
    $region25: #{tpu_custom_call.1} parent=1 // pred_fallthru
      _
    // Predicated region
    $region26: #{tpu_custom_call.1} parent=1 // pred_check
      _
    $region27: #{tpu_custom_call.1} parent=1 // pred_check_branch
      %86 = sbr.rel (0) target = $region29
    $region28: #{tpu_custom_call.1} parent=1 // pred_region
      %88 = dma.done [#allocation4], 128
    $region29: #{tpu_custom_call.1} parent=1 // pred_fallthru
      _
    %89 = vsyncpa [#allocation3], 1
    %90 = vsyncpa [#allocation6], 1
    %91 = vsyncpa [#allocation4], 1

</llo_original>
